<compile_context>
chip_gen: v6e
topology: v6e:2x2x1
jax: 0.10.0
libtpu: 0.0.40
codegen_flags: <defaults>
</compile_context>

<pallas_src>
import jax
import jax.numpy as jnp
from jax.experimental import pallas as pl
from jax.experimental.pallas import tpu as pltpu


# ----------------------------- kernel -------------------------------------


def meanpool_kernel(seq_ref, seqe_ref, src_ref,
                    w_seq_ref, w_edge_ref, w_src_ref, b_ref,
                    o_ref, acc_ref):
    # seq_ref  : [TB, NT*F]   seqe_ref  : [TB, NT*E]   src_ref : [TB, F]
    # w_seq_ref: [NT*F, F]    w_edge_ref: [NT*E, F]    w_src   : [F, F]
    # b_ref    : [1, F]       o_ref     : [TB, F]      acc_ref : [TB, F] f32
    k = pl.program_id(1)

    @pl.when(k == 0)
    def _():
        acc_ref[...] = jnp.zeros_like(acc_ref)

    # mean(seq) @ W_seq and mean(seq_e) @ W_edge, with the 1/N mean folded
    # into the (tiled) weights — pure MXU work, no cross-sublane reduce.
    acc_ref[...] += (
        jnp.dot(seq_ref[...], w_seq_ref[...],
                preferred_element_type=jnp.float32)
        + jnp.dot(seqe_ref[...], w_edge_ref[...],
                  preferred_element_type=jnp.float32)
    )

    @pl.when(k == pl.num_programs(1) - 1)
    def _():
        z = (acc_ref[...]
             + jnp.dot(src_ref[...], w_src_ref[...],
                       preferred_element_type=jnp.float32)
             + b_ref[...])
        # LeakyReLU (PyTorch default negative_slope = 0.01)
        o_ref[...] = jnp.where(z > 0, z, 0.01 * z).astype(o_ref.dtype)


# ----------------------------- sizing helpers ------------------------------


def _pad_up(x, m):
    return ((x + m - 1) // m) * m


def _tile_bytes(shape, itemsize=4):
    # VMEM tile cost with (sublane=8, lane=128) padding on the last two dims.
    s = list(shape)
    s[-1] = _pad_up(s[-1], 128)
    if len(s) >= 2:
        s[-2] = _pad_up(s[-2], 8)
    n = 1
    for d in s:
        n *= d
    return n * itemsize


def _vmem_capacity_bytes():
    # Generation-aware physical VMEM (64 MiB per TC on v7x, 128 MiB v5e/v6e).
    try:
        return int(pltpu.get_tpu_info().vmem_capacity_bytes)
    except Exception:
        return 64 << 20   # conservative fallback (v7x per-TensorCore VMEM)


def _vmem_estimate(tb, nt, f, e):
    # Conservatively assume every pipelined block is double-buffered.
    blocks = (_tile_bytes((tb, nt * f))          # seq block
              + _tile_bytes((tb, nt * e))        # seq_e block
              + _tile_bytes((tb, f))             # src block
              + _tile_bytes((tb, f))             # out block
              + _tile_bytes((nt * f, f))         # w_seq_rep block
              + _tile_bytes((nt * e, f))         # w_edge_rep block
              + _tile_bytes((f, f))              # w_src
              + _tile_bytes((1, f)))             # bias
    scratch = _tile_bytes((tb, f))               # f32 accumulator
    return 2 * blocks + scratch


def _choose_nt(n, f, e, budget_bytes):
    """Neighbor-chunk size for the inner reduction axis (divisor of n)."""
    if _vmem_estimate(8, n, f, e) <= budget_bytes:
        return n
    for nt in range(n - 1, 0, -1):
        if n % nt:
            continue
        # keep the lane dimension of partial blocks a multiple of 128
        if (nt * f) % 128 or (nt * e) % 128:
            continue
        if _vmem_estimate(8, nt, f, e) <= budget_bytes:
            return nt
    # TODO(synk): pathological N/F/E combos (no 128-aligned divisor fits the
    # budget) fall back to a single big block; never hit at realistic shapes.
    return n


def _choose_tb(b, nt, f, e, budget_bytes):
    """Largest power-of-two multiple of 8 batch tile that fits the budget."""
    cap = _pad_up(b, 8)
    if b >= 16:
        # keep >= 2 batch tiles so the "parallel" axis can shard across the
        # two TensorCores on v7x (no effect on single-TC v5e/v6e)
        cap = min(cap, _pad_up(pl.cdiv(b, 2), 8))
    cap = min(cap, 4096)
    best = 8
    tb = 8
    while tb <= cap:
        if _vmem_estimate(tb, nt, f, e) <= budget_bytes:
            best = tb
        tb *= 2
    return best


# ----------------------------- wrapper -------------------------------------


def prepare_weights(w, b, num_neighbors):
    """One-time weight prep (hoisted out of the per-call hot path).

    w : [F, F + E + F]  (fc1.weight, PyTorch [out, in] layout)
    b : [F]             (fc1.bias)
    num_neighbors : N   (the mean 1/N is folded into the tiled weights)

    Returns (w_seq_rep [N*F, F], w_edge_rep [N*E, F], w_src [F, F], b2 [1, F])
    such that
        cat([mean(seq), mean(seq_e), src], -1) @ w.T
          == reshape(seq, [B, N*F]) @ w_seq_rep
           + reshape(seq_e, [B, N*E]) @ w_edge_rep
           + src @ w_src                                         (exact).
    """
    f_dim = w.shape[0]
    in_dim = w.shape[1]
    e_dim = in_dim - 2 * f_dim
    n = num_neighbors

    w_t = jnp.transpose(w)                       # [F + E + F, F]
    w_seq = w_t[:f_dim, :]                       # [F, F]
    w_edge = w_t[f_dim:f_dim + e_dim, :]         # [E, F]
    w_src = w_t[f_dim + e_dim:, :]               # [F, F]

    inv_n = 1.0 / n
    w_seq_rep = jnp.tile(w_seq * inv_n, (n, 1))    # [N*F, F]
    w_edge_rep = jnp.tile(w_edge * inv_n, (n, 1))  # [N*E, F]
    b2 = b.reshape(1, f_dim)
    return w_seq_rep, w_edge_rep, w_src, b2


def _mean_pool_pallas(seq, seq_e, src, w_seq_rep, w_edge_rep, w_src, b2):
    B, N, F = seq.shape
    E = seq_e.shape[-1]

    # Lane-dense, contiguous (free) reshapes: [B, N, F] -> [B, N*F].
    seq2d = seq.reshape(B, N * F)
    seqe2d = seq_e.reshape(B, N * E)

    vmem_cap = _vmem_capacity_bytes()
    budget = (vmem_cap * 3) // 8            # ~24 MiB on v7x, ~48 MiB on v5e/v6e

    NT = _choose_nt(N, F, E, budget)
    TB = _choose_tb(B, NT, F, E, budget)
    K = N // NT
    grid = (pl.cdiv(B, TB), K)              # ragged last batch block: OOB reads
                                            # are don't-care, OOB writes dropped

    est = _vmem_estimate(TB, NT, F, E)
    vmem_limit = int(min((vmem_cap * 3) // 4, max(32 << 20, 2 * est)))

    out = pl.pallas_call(
        meanpool_kernel,
        out_shape=jax.ShapeDtypeStruct((B, F), jnp.float32),
        grid_spec=pltpu.PrefetchScalarGridSpec(
            num_scalar_prefetch=0,
            grid=grid,
            in_specs=[
                pl.BlockSpec((TB, NT * F), lambda i, k: (i, k)),   # seq2d
                pl.BlockSpec((TB, NT * E), lambda i, k: (i, k)),   # seqe2d
                pl.BlockSpec((TB, F),      lambda i, k: (i, 0)),   # src
                pl.BlockSpec((NT * F, F),  lambda i, k: (k, 0)),   # w_seq_rep
                pl.BlockSpec((NT * E, F),  lambda i, k: (k, 0)),   # w_edge_rep
                pl.BlockSpec((F, F),       lambda i, k: (0, 0)),   # w_src
                pl.BlockSpec((1, F),       lambda i, k: (0, 0)),   # bias
            ],
            out_specs=pl.BlockSpec((TB, F), lambda i, k: (i, 0)),
            scratch_shapes=[pltpu.VMEM((TB, F), jnp.float32)],
        ),
        compiler_params=pltpu.CompilerParams(
            dimension_semantics=("parallel", "arbitrary"),
            vmem_limit_bytes=vmem_limit,
        ),
    )(seq2d, seqe2d, src, w_seq_rep, w_edge_rep, w_src, b2)

    return out


_mean_pool_pallas_jit = jax.jit(_mean_pool_pallas)


def mean_pool_forward(src, src_t, seq, seq_t, seq_e, mask, params):
    """Matches MeanPool.forward.

    src : [B, F]    seq : [B, N, F]    seq_e : [B, N, E]
    params: output of prepare_weights(fc1.weight, fc1.bias, N)
    src_t, seq_t, mask are unused by the reference forward and ignored here.
    """
    del src_t, seq_t, mask  # unused in the reference forward
    w_seq_rep, w_edge_rep, w_src, b2 = params
    out = _mean_pool_pallas_jit(seq, seq_e, src, w_seq_rep, w_edge_rep, w_src, b2)
    return out, None


# ----------------------------- reference & test -----------------------------


def reference_forward(src, seq, seq_e, w, b):
    seq_x = jnp.concatenate([seq, seq_e], axis=2)
    hn = jnp.mean(seq_x, axis=1)
    x = jnp.concatenate([hn, src], axis=-1)
    z = x @ w.T + b
    return jnp.where(z > 0, z, 0.01 * z)


if __name__ == "__main__":
    feat_dim, edge_dim = 32, 16
    B, N = 8, 8

    key = jax.random.PRNGKey(0)
    k_src, k_seq, k_seqe, k_w, k_b, k_t = jax.random.split(key, 6)

    src = jax.random.normal(k_src, (B, feat_dim), dtype=jnp.float32)
    seq = jax.random.normal(k_seq, (B, N, feat_dim), dtype=jnp.float32)
    seq_e = jax.random.normal(k_seqe, (B, N, edge_dim), dtype=jnp.float32)
    src_t = jax.random.normal(k_t, (B, 1), dtype=jnp.float32)   # unused
    seq_t = jnp.zeros((B, N), dtype=jnp.float32)                # unused
    mask = jnp.zeros((B, N), dtype=jnp.float32)                 # unused

    # fc1: Linear(edge_dim + 2*feat_dim, feat_dim), xavier_normal_ weight init.
    in_dim = edge_dim + 2 * feat_dim
    out_dim = feat_dim
    xavier_std = (2.0 / (in_dim + out_dim)) ** 0.5
    w = xavier_std * jax.random.normal(k_w, (out_dim, in_dim), dtype=jnp.float32)
    bound = 1.0 / (in_dim ** 0.5)
    b = jax.random.uniform(k_b, (out_dim,), minval=-bound, maxval=bound,
                           dtype=jnp.float32)

    # Weight prep (split + mean-folded tiling) is done ONCE, off the hot path.
    params = prepare_weights(w, b, N)

    out, none_ret = mean_pool_forward(src, src_t, seq, seq_t, seq_e, mask, params)
    out = jax.block_until_ready(out)

    ref = reference_forward(src, seq, seq_e, w, b)
    assert out.shape == (B, feat_dim)
    assert none_ret is None
    assert jnp.allclose(out, ref, atol=1e-5, rtol=1e-5)

    # Exercise a batch that is NOT a multiple of the tile (ragged last block;
    # no jnp.pad path anymore) and re-assert the mean-folded numerics.
    B2 = 13
    kk = jax.random.split(jax.random.PRNGKey(1), 3)
    src2 = jax.random.normal(kk[0], (B2, feat_dim), dtype=jnp.float32)
    seq2 = jax.random.normal(kk[1], (B2, N, feat_dim), dtype=jnp.float32)
    seq_e2 = jax.random.normal(kk[2], (B2, N, edge_dim), dtype=jnp.float32)
    out2, _ = mean_pool_forward(src2, None, seq2, None, seq_e2, None, params)
    out2 = jax.block_until_ready(out2)
    ref2 = reference_forward(src2, seq2, seq_e2, w, b)
    assert out2.shape == (B2, feat_dim)
    assert jnp.allclose(out2, ref2, atol=1e-5, rtol=1e-5)

    print("KERNEL_OK")
</pallas_src>

<mosaic_0001>
module attributes {stable_mosaic.version = 11 : i64} {
  func.func @meanpool_kernel(%arg0: i32, %arg1: i32, %arg2: memref<8x256xf32, #tpu.memory_space<vmem>>, %arg3: memref<8x128xf32, #tpu.memory_space<vmem>>, %arg4: memref<8x32xf32, #tpu.memory_space<vmem>>, %arg5: memref<256x32xf32, #tpu.memory_space<vmem>>, %arg6: memref<128x32xf32, #tpu.memory_space<vmem>>, %arg7: memref<32x32xf32, #tpu.memory_space<vmem>>, %arg8: memref<1x32xf32, #tpu.memory_space<vmem>>, %arg9: memref<8x32xf32, #tpu.memory_space<vmem>>, %arg10: memref<8x32xf32, #tpu.memory_space<vmem>>) attributes {dimension_semantics = [#tpu.dimension_semantics<parallel>, #tpu.dimension_semantics<arbitrary>], iteration_bounds = array<i64: 1, 1>, scalar_prefetch = 0 : i64, scratch_operands = 1 : i64, tpu.core_type = #tpu.core_type<tc>, window_params = [{transform_indices = @transform_0, window_bounds = array<i64: 8, 256>}, {transform_indices = @transform_1, window_bounds = array<i64: 8, 128>}, {transform_indices = @transform_2, window_bounds = array<i64: 8, 32>}, {transform_indices = @transform_3, window_bounds = array<i64: 256, 32>}, {transform_indices = @transform_4, window_bounds = array<i64: 128, 32>}, {pipeline_mode = #tpu.pipeline_mode<synchronous>, transform_indices = @transform_5, window_bounds = array<i64: 32, 32>}, {pipeline_mode = #tpu.pipeline_mode<synchronous>, transform_indices = @transform_6, window_bounds = array<i64: 1, 32>}, {transform_indices = @transform_7, window_bounds = array<i64: 8, 32>}]} {
    %c0_i32 = arith.constant 0 : i32
    %0 = arith.cmpi eq, %arg1, %c0_i32 : i32
    %1 = arith.extui %0 : i1 to i32
    %c0_i32_0 = arith.constant 0 : i32
    %2 = arith.cmpi ne, %1, %c0_i32_0 : i32
    scf.if %2 {
      %cst_15 = arith.constant 0.000000e+00 : f32
      %16 = vector.broadcast %cst_15 : f32 to vector<8x32xf32>
      %c0_16 = arith.constant 0 : index
      %c0_17 = arith.constant 0 : index
      %17 = vector.load %arg10[%c0_16, %c0_17] : memref<8x32xf32, #tpu.memory_space<vmem>>, vector<8x32xf32>
      tpu.vector_store %arg10[%c0_16, %c0_17], %16 {strides = array<i32>} : memref<8x32xf32, #tpu.memory_space<vmem>>, vector<8x32xf32>,
    } else {
    }
    %c0 = arith.constant 0 : index
    %c0_1 = arith.constant 0 : index
    %3 = vector.load %arg10[%c0, %c0_1] : memref<8x32xf32, #tpu.memory_space<vmem>>, vector<8x32xf32>
    %c0_2 = arith.constant 0 : index
    %c0_3 = arith.constant 0 : index
    %4 = vector.load %arg2[%c0_2, %c0_3] : memref<8x256xf32, #tpu.memory_space<vmem>>, vector<8x256xf32>
    %c0_4 = arith.constant 0 : index
    %c0_5 = arith.constant 0 : index
    %5 = vector.load %arg5[%c0_4, %c0_5] : memref<256x32xf32, #tpu.memory_space<vmem>>, vector<256x32xf32>
    %cst = arith.constant dense<0.000000e+00> : vector<8x32xf32>
    %6 = tpu.matmul %4, %5, %cst {dimension_numbers = #tpu.dot_dimension_numbers<[1], [0], [0], [1], [0, 0, 1, 1], [], []>} : vector<8x256xf32>, vector<256x32xf32>, vector<8x32xf32> -> vector<8x32xf32>
    %c0_6 = arith.constant 0 : index
    %c0_7 = arith.constant 0 : index
    %7 = vector.load %arg3[%c0_6, %c0_7] : memref<8x128xf32, #tpu.memory_space<vmem>>, vector<8x128xf32>
    %c0_8 = arith.constant 0 : index
    %c0_9 = arith.constant 0 : index
    %8 = vector.load %arg6[%c0_8, %c0_9] : memref<128x32xf32, #tpu.memory_space<vmem>>, vector<128x32xf32>
    %cst_10 = arith.constant dense<0.000000e+00> : vector<8x32xf32>
    %9 = tpu.matmul %7, %8, %cst_10 {dimension_numbers = #tpu.dot_dimension_numbers<[1], [0], [0], [1], [0, 0, 1, 1], [], []>} : vector<8x128xf32>, vector<128x32xf32>, vector<8x32xf32> -> vector<8x32xf32>
    %10 = arith.addf %6, %9 : vector<8x32xf32>
    %11 = arith.addf %3, %10 : vector<8x32xf32>
    %c0_11 = arith.constant 0 : index
    %c0_12 = arith.constant 0 : index
    %12 = vector.load %arg10[%c0_11, %c0_12] : memref<8x32xf32, #tpu.memory_space<vmem>>, vector<8x32xf32>
    tpu.vector_store %arg10[%c0_11, %c0_12], %11 {strides = array<i32>} : memref<8x32xf32, #tpu.memory_space<vmem>>, vector<8x32xf32>,
    %c0_i32_13 = arith.constant 0 : i32
    %13 = arith.cmpi eq, %arg1, %c0_i32_13 : i32
    %14 = arith.extui %13 : i1 to i32
    %c0_i32_14 = arith.constant 0 : i32
    %15 = arith.cmpi ne, %14, %c0_i32_14 : i32
    scf.if %15 {
      %c0_15 = arith.constant 0 : index
      %c0_16 = arith.constant 0 : index
      %16 = vector.load %arg10[%c0_15, %c0_16] : memref<8x32xf32, #tpu.memory_space<vmem>>, vector<8x32xf32>
      %c0_17 = arith.constant 0 : index
      %c0_18 = arith.constant 0 : index
      %17 = vector.load %arg4[%c0_17, %c0_18] : memref<8x32xf32, #tpu.memory_space<vmem>>, vector<8x32xf32>
      %c0_19 = arith.constant 0 : index
      %c0_20 = arith.constant 0 : index
      %18 = vector.load %arg7[%c0_19, %c0_20] : memref<32x32xf32, #tpu.memory_space<vmem>>, vector<32x32xf32>
      %cst_21 = arith.constant dense<0.000000e+00> : vector<8x32xf32>
      %19 = tpu.matmul %17, %18, %cst_21 {dimension_numbers = #tpu.dot_dimension_numbers<[1], [0], [0], [1], [0, 0, 1, 1], [], []>} : vector<8x32xf32>, vector<32x32xf32>, vector<8x32xf32> -> vector<8x32xf32>
      %20 = arith.addf %16, %19 : vector<8x32xf32>
      %c0_22 = arith.constant 0 : index
      %c0_23 = arith.constant 0 : index
      %21 = vector.load %arg8[%c0_22, %c0_23] : memref<1x32xf32, #tpu.memory_space<vmem>>, vector<1x32xf32>
      %22 = vector.broadcast %21 : vector<1x32xf32> to vector<8x32xf32>
      %23 = arith.addf %20, %22 : vector<8x32xf32>
      %cst_24 = arith.constant 0.000000e+00 : f32
      %24 = vector.broadcast %cst_24 : f32 to vector<8x32xf32>
      %25 = arith.cmpf ogt, %23, %24 : vector<8x32xf32>
      %cst_25 = arith.constant 0.00999999977 : f32
      %26 = vector.broadcast %cst_25 : f32 to vector<8x32xf32>
      %27 = arith.mulf %26, %23 : vector<8x32xf32>
      %28 = arith.select %25, %23, %27 : vector<8x32xi1>, vector<8x32xf32>
      %c0_26 = arith.constant 0 : index
      %c0_27 = arith.constant 0 : index
      %29 = vector.load %arg9[%c0_26, %c0_27] : memref<8x32xf32, #tpu.memory_space<vmem>>, vector<8x32xf32>
      tpu.vector_store %arg9[%c0_26, %c0_27], %28 {strides = array<i32>} : memref<8x32xf32, #tpu.memory_space<vmem>>, vector<8x32xf32>,
    } else {
    }
    return
  }
  func.func @transform_0(%arg0: i32, %arg1: i32) -> (i32, i32) {
    %c0_i32 = arith.constant 0 : i32
    return %arg0, %arg1 : i32, i32
  }
  func.func @transform_1(%arg0: i32, %arg1: i32) -> (i32, i32) {
    %c0_i32 = arith.constant 0 : i32
    return %arg0, %arg1 : i32, i32
  }
  func.func @transform_2(%arg0: i32, %arg1: i32) -> (i32, i32) {
    %c0_i32 = arith.constant 0 : i32
    %c0_i32_0 = arith.constant 0 : i32
    return %arg0, %c0_i32 : i32, i32
  }
  func.func @transform_3(%arg0: i32, %arg1: i32) -> (i32, i32) {
    %c0_i32 = arith.constant 0 : i32
    %c0_i32_0 = arith.constant 0 : i32
    return %arg1, %c0_i32 : i32, i32
  }
  func.func @transform_4(%arg0: i32, %arg1: i32) -> (i32, i32) {
    %c0_i32 = arith.constant 0 : i32
    %c0_i32_0 = arith.constant 0 : i32
    return %arg1, %c0_i32 : i32, i32
  }
  func.func @transform_5(%arg0: i32, %arg1: i32) -> (i32, i32) {
    %c0_i32 = arith.constant 0 : i32
    %c0_i32_0 = arith.constant 0 : i32
    %c0_i32_1 = arith.constant 0 : i32
    return %c0_i32, %c0_i32_0 : i32, i32
  }
  func.func @transform_6(%arg0: i32, %arg1: i32) -> (i32, i32) {
    %c0_i32 = arith.constant 0 : i32
    %c0_i32_0 = arith.constant 0 : i32
    %c0_i32_1 = arith.constant 0 : i32
    return %c0_i32, %c0_i32_0 : i32, i32
  }
  func.func @transform_7(%arg0: i32, %arg1: i32) -> (i32, i32) {
    %c0_i32 = arith.constant 0 : i32
    %c0_i32_0 = arith.constant 0 : i32
    return %arg0, %c0_i32 : i32, i32
  }
}

</mosaic_0001>

<llo_original>
// kernel: _mean_pool_pallas.1
$region0: #{_mean_pool_pallas.1}
  #allocation0 [shape = 'u32[]', space=smem, size = 0x4, offset = 0x4, fixed_abs, tag = 'smem constant byte address 0x4 - core index']
  #allocation1 [shape = 'u32[144,128]{1,0:T(1,128)}', space=vmem, size = 0x12000, scoped, tag = 'internal scratch']
  #allocation2 [shape = 'f32[8,32]{1,0:T(8,128)}', space=vmem, size = 0x1000, scoped, tag = 'scratch operand']
  %s0 = inlined_call_operand.vmem [shape: f32[8,256], index: 0, kind: input, shape index: {}]
  %s1 = inlined_call_operand.vmem [shape: f32[8,128], index: 1, kind: input, shape index: {}]
  %s2 = inlined_call_operand.vmem [shape: f32[8,32], index: 2, kind: input, shape index: {}]
  %s3 = inlined_call_operand.vmem [shape: f32[256,32], index: 3, kind: input, shape index: {}]
  %s4 = inlined_call_operand.vmem [shape: f32[128,32], index: 4, kind: input, shape index: {}]
  %s5 = inlined_call_operand.vmem [shape: f32[32,32], index: 5, kind: input, shape index: {}]
  %s6 = inlined_call_operand.vmem [shape: f32[1,32], index: 6, kind: input, shape index: {}]
  %s7 = inlined_call_operand.hbm [shape: f32[8,32], index: 7, kind: output, shape index: {}]
  %s8 = sld [smem:[#allocation0]]
  $region46: #{_mean_pool_pallas.1} parent=0
    _
  %s10 = ssub.s32 1, %s8
  %s11 = scalar_select 0, %s10, %s8
  $region1: #{_mean_pool_pallas.1} parent=0
    #allocation3 [shape = 'u8[4096]{0}', space=vmem, size = 0x1000, scoped, tag = 'output window, operand 0, single buffered']
    #allocation4 [shape = 's32[1]{0}', space=sflag, size = 0x4, scoped, tag = 'scoped memory for _mean_pool_pallas.1']
    %12 = vsyncpa [#allocation4], 0
    // Predicated region
    $region2: #{_mean_pool_pallas.1} parent=1 // pred_check
      _
    $region3: #{_mean_pool_pallas.1} parent=1 // pred_check_branch
      %14 = sbr.rel (0) target = $region5
    $region4: #{_mean_pool_pallas.1} parent=1 // pred_region
      _
    $region5: #{_mean_pool_pallas.1} parent=1 // pred_fallthru
      _
    // Predicated region
    $region6: #{_mean_pool_pallas.1} parent=1 // pred_check
      _
    $region7: #{_mean_pool_pallas.1} parent=1 // pred_check_branch
      %16 = sbr.rel (0) target = $region9
    $region8: #{_mean_pool_pallas.1} parent=1 // pred_region
      _
    $region9: #{_mean_pool_pallas.1} parent=1 // pred_fallthru
      _
    // Predicated region
    $region10: #{_mean_pool_pallas.1} parent=1 // pred_check
      _
    $region11: #{_mean_pool_pallas.1} parent=1 // pred_check_branch
      %18 = sbr.rel (0) target = $region13
    $region12: #{_mean_pool_pallas.1} parent=1 // pred_region
      _
    $region13: #{_mean_pool_pallas.1} parent=1 // pred_fallthru
      _
    // Predicated region
    $region14: #{_mean_pool_pallas.1} parent=1 // pred_check
      _
    $region15: #{_mean_pool_pallas.1} parent=1 // pred_check_branch
      %20 = sbr.rel (0) target = $region17
    $region16: #{_mean_pool_pallas.1} parent=1 // pred_region
      _
    $region17: #{_mean_pool_pallas.1} parent=1 // pred_fallthru
      _
    // Predicated region
    $region18: #{_mean_pool_pallas.1} parent=1 // pred_check
      _
    $region19: #{_mean_pool_pallas.1} parent=1 // pred_check_branch
      %22 = sbr.rel (0) target = $region21
    $region20: #{_mean_pool_pallas.1} parent=1 // pred_region
      _
    $region21: #{_mean_pool_pallas.1} parent=1 // pred_fallthru
      _
    // Predicated region
    $region22: #{_mean_pool_pallas.1} parent=1 // pred_check
      _
    $region23: #{_mean_pool_pallas.1} parent=1 // pred_check_branch
      %24 = sbr.rel (0) target = $region25
    $region24: #{_mean_pool_pallas.1} parent=1 // pred_region
      _
    $region25: #{_mean_pool_pallas.1} parent=1 // pred_fallthru
      _
    // Predicated region
    $region26: #{_mean_pool_pallas.1} parent=1 // pred_check
      _
    $region27: #{_mean_pool_pallas.1} parent=1 // pred_check_branch
      %26 = sbr.rel (0) target = $region29
    $region28: #{_mean_pool_pallas.1} parent=1 // pred_region
      _
    $region29: #{_mean_pool_pallas.1} parent=1 // pred_fallthru
      _
    %p27 = scmp.eq.s32.totalorder 0, 0
    // Predicated region
    $region30: #{_mean_pool_pallas.1} parent=1 // pred_check
      %p28 = pneg %p27
    $region31: #{_mean_pool_pallas.1} parent=1 // pred_check_branch
      %30 = sbr.rel (%p28) target = $region33
    $region32: #{_mean_pool_pallas.1} parent=1 // pred_region
      %vm31 = vcmask 261120
      %32 = vst.msk [vmem:[#allocation2] sm:$0xff] %vm31, 0.0
    $region33: #{_mean_pool_pallas.1} parent=1 // pred_fallthru
      _
    %v33 = vld [vmem:[#allocation2] sm:$0xff]
    %v34 = vld [vmem:[%s0] sm:$0xff]
    %v35 = vld [vmem:[%s0 + $0x8] sm:$0xff]
    %v36 = vld [vmem:[%s3] sm:$0xff]
    %v37 = vld [vmem:[%s3 + $0x8] sm:$0xff]
    %v38 = vld [vmem:[%s3 + $0x10] sm:$0xff]
    %v39 = vld [vmem:[%s3 + $0x18] sm:$0xff]
    %v40 = vld [vmem:[%s3 + $0x20] sm:$0xff]
    %v41 = vld [vmem:[%s3 + $0x28] sm:$0xff]
    %v42 = vld [vmem:[%s3 + $0x30] sm:$0xff]
    %v43 = vld [vmem:[%s3 + $0x38] sm:$0xff]
    %v44 = vld [vmem:[%s3 + $0x40] sm:$0xff]
    %v45 = vld [vmem:[%s3 + $0x48] sm:$0xff]
    %v46 = vld [vmem:[%s3 + $0x50] sm:$0xff]
    %v47 = vld [vmem:[%s3 + $0x58] sm:$0xff]
    %v48 = vld [vmem:[%s3 + $0x60] sm:$0xff]
    %v49 = vld [vmem:[%s3 + $0x68] sm:$0xff]
    %v50 = vld [vmem:[%s3 + $0x70] sm:$0xff]
    %v51 = vld [vmem:[%s3 + $0x78] sm:$0xff]
    %v52 = vld [vmem:[%s3 + $0x80] sm:$0xff]
    %v53 = vld [vmem:[%s3 + $0x88] sm:$0xff]
    %v54 = vld [vmem:[%s3 + $0x90] sm:$0xff]
    %v55 = vld [vmem:[%s3 + $0x98] sm:$0xff]
    %v56 = vld [vmem:[%s3 + $0xa0] sm:$0xff]
    %v57 = vld [vmem:[%s3 + $0xa8] sm:$0xff]
    %v58 = vld [vmem:[%s3 + $0xb0] sm:$0xff]
    %v59 = vld [vmem:[%s3 + $0xb8] sm:$0xff]
    %v60 = vld [vmem:[%s3 + $0xc0] sm:$0xff]
    %v61 = vld [vmem:[%s3 + $0xc8] sm:$0xff]
    %v62 = vld [vmem:[%s3 + $0xd0] sm:$0xff]
    %v63 = vld [vmem:[%s3 + $0xd8] sm:$0xff]
    %v64 = vld [vmem:[%s3 + $0xe0] sm:$0xff]
    %v65 = vld [vmem:[%s3 + $0xe8] sm:$0xff]
    %v66 = vld [vmem:[%s3 + $0xf0] sm:$0xff]
    %v67 = vld [vmem:[%s3 + $0xf8] sm:$0xff]
    %v68 = vld [vmem:[%s1] sm:$0xff]
    %v69 = vld [vmem:[%s4] sm:$0xff]
    %v70 = vld [vmem:[%s4 + $0x8] sm:$0xff]
    %v71 = vld [vmem:[%s4 + $0x10] sm:$0xff]
    %v72 = vld [vmem:[%s4 + $0x18] sm:$0xff]
    %v73 = vld [vmem:[%s4 + $0x20] sm:$0xff]
    %v74 = vld [vmem:[%s4 + $0x28] sm:$0xff]
    %v75 = vld [vmem:[%s4 + $0x30] sm:$0xff]
    %v76 = vld [vmem:[%s4 + $0x38] sm:$0xff]
    %v77 = vld [vmem:[%s4 + $0x40] sm:$0xff]
    %v78 = vld [vmem:[%s4 + $0x48] sm:$0xff]
    %v79 = vld [vmem:[%s4 + $0x50] sm:$0xff]
    %v80 = vld [vmem:[%s4 + $0x58] sm:$0xff]
    %v81 = vld [vmem:[%s4 + $0x60] sm:$0xff]
    %v82 = vld [vmem:[%s4 + $0x68] sm:$0xff]
    %v83 = vld [vmem:[%s4 + $0x70] sm:$0xff]
    %v84 = vld [vmem:[%s4 + $0x78] sm:$0xff]
    %85 = vmatprep.subr.mxu0 0.0
    %86 = vmatpush1.msra.mxu0 %v84
    %87 = vmatprep.subr.mxu0 0.0
    %88 = vmatpush1.msra.mxu0 %v83
    %89 = vmatprep.subr.mxu0 0.0
    %90 = vmatpush1.msra.mxu0 %v82
    %91 = vmatprep.subr.mxu0 0.0
    %92 = vmatpush1.msra.mxu0 %v81
    %93 = vmatprep.subr.mxu0 0.0
    %94 = vmatpush1.msra.mxu0 %v80
    %95 = vmatprep.subr.mxu0 0.0
    %96 = vmatpush1.msra.mxu0 %v79
    %97 = vmatprep.subr.mxu0 0.0
    %98 = vmatpush1.msra.mxu0 %v78
    %99 = vmatprep.subr.mxu0 0.0
    %100 = vmatpush1.msra.mxu0 %v77
    %101 = vmatprep.subr.mxu0 0.0
    %102 = vmatpush1.msra.mxu0 %v76
    %103 = vmatprep.subr.mxu0 0.0
    %104 = vmatpush1.msra.mxu0 %v75
    %105 = vmatprep.subr.mxu0 0.0
    %106 = vmatpush1.msra.mxu0 %v74
    %107 = vmatprep.subr.mxu0 0.0
    %108 = vmatpush1.msra.mxu0 %v73
    %109 = vmatprep.subr.mxu0 0.0
    %110 = vmatpush1.msra.mxu0 %v72
    %111 = vmatprep.subr.mxu0 0.0
    %112 = vmatpush1.msra.mxu0 %v71
    %113 = vmatprep.subr.mxu0 0.0
    %114 = vmatpush1.msra.mxu0 %v70
    %115 = vmatprep.subr.mxu0 0.0
    %116 = vmatpush1.msra.mxu0 %v69
    %117 = vmatprep.subr.mxu0 0.0
    %118 = vmatpush2.msra.mxu0 0.0
    %119 = vmatprep.subr.mxu0 0.0
    %120 = vmatpush2.msra.mxu0 0.0
    %121 = vmatprep.subr.mxu0 0.0
    %122 = vmatpush2.msra.mxu0 0.0
    %123 = vmatprep.subr.mxu0 0.0
    %124 = vmatpush2.msra.mxu0 0.0
    %125 = vmatprep.subr.mxu0 0.0
    %126 = vmatpush2.msra.mxu0 0.0
    %127 = vmatprep.subr.mxu0 0.0
    %128 = vmatpush2.msra.mxu0 0.0
    %129 = vmatprep.subr.mxu0 0.0
    %130 = vmatpush2.msra.mxu0 0.0
    %131 = vmatprep.subr.mxu0 0.0
    %132 = vmatpush2.msra.mxu0 0.0
    %133 = vmatprep.subr.mxu0 0.0
    %134 = vmatpush2.msra.mxu0 0.0
    %135 = vmatprep.subr.mxu0 0.0
    %136 = vmatpush2.msra.mxu0 0.0
    %137 = vmatprep.subr.mxu0 0.0
    %138 = vmatpush2.msra.mxu0 0.0
    %139 = vmatprep.subr.mxu0 0.0
    %140 = vmatpush2.msra.mxu0 0.0
    %141 = vmatprep.subr.mxu0 0.0
    %142 = vmatpush2.msra.mxu0 0.0
    %143 = vmatprep.subr.mxu0 0.0
    %144 = vmatpush2.msra.mxu0 0.0
    %145 = vmatprep.subr.mxu0 0.0
    %146 = vmatpush2.msra.mxu0 0.0
    %147 = vmatprep.subr.mxu0 0.0
    %148 = vmatpush2.msra.mxu0 0.0
    %149 = vmatprep.mubr.f32.mxu0 0.0
    %150 = vmatmul.mubr.f32.gmra.mxu0 %v68
    %v151 = vpop.f32.mrf.mxu0
    %v152 = vadd.f32 0.0, %v151
    %v153 = vpop.f32.mrf.mxu0
    %154 = vdwg.mxu0
    %155 = vmatprep.subr.mxu0 0.0
    %156 = vmatpush1.msra.mxu0 %v51
    %157 = vmatprep.subr.mxu0 0.0
    %158 = vmatpush1.msra.mxu0 %v50
    %159 = vmatprep.subr.mxu0 0.0
    %160 = vmatpush1.msra.mxu0 %v49
    %161 = vmatprep.subr.mxu0 0.0
    %162 = vmatpush1.msra.mxu0 %v48
    %163 = vmatprep.subr.mxu0 0.0
    %164 = vmatpush1.msra.mxu0 %v47
    %165 = vmatprep.subr.mxu0 0.0
    %166 = vmatpush1.msra.mxu0 %v46
    %167 = vmatprep.subr.mxu0 0.0
    %168 = vmatpush1.msra.mxu0 %v45
    %169 = vmatprep.subr.mxu0 0.0
    %170 = vmatpush1.msra.mxu0 %v44
    %171 = vmatprep.subr.mxu0 0.0
    %172 = vmatpush1.msra.mxu0 %v43
    %173 = vmatprep.subr.mxu0 0.0
    %174 = vmatpush1.msra.mxu0 %v42
    %175 = vmatprep.subr.mxu0 0.0
    %176 = vmatpush1.msra.mxu0 %v41
    %177 = vmatprep.subr.mxu0 0.0
    %178 = vmatpush1.msra.mxu0 %v40
    %179 = vmatprep.subr.mxu0 0.0
    %180 = vmatpush1.msra.mxu0 %v39
    %181 = vmatprep.subr.mxu0 0.0
    %182 = vmatpush1.msra.mxu0 %v38
    %183 = vmatprep.subr.mxu0 0.0
    %184 = vmatpush1.msra.mxu0 %v37
    %185 = vmatprep.subr.mxu0 0.0
    %186 = vmatpush1.msra.mxu0 %v36
    %187 = vmatprep.subr.mxu0 0.0
    %188 = vmatpush2.msra.mxu0 %v67
    %189 = vmatprep.subr.mxu0 0.0
    %190 = vmatpush2.msra.mxu0 %v66
    %191 = vmatprep.subr.mxu0 0.0
    %192 = vmatpush2.msra.mxu0 %v65
    %193 = vmatprep.subr.mxu0 0.0
    %194 = vmatpush2.msra.mxu0 %v64
    %195 = vmatprep.subr.mxu0 0.0
    %196 = vmatpush2.msra.mxu0 %v63
    %197 = vmatprep.subr.mxu0 0.0
    %198 = vmatpush2.msra.mxu0 %v62
    %199 = vmatprep.subr.mxu0 0.0
    %200 = vmatpush2.msra.mxu0 %v61
    %201 = vmatprep.subr.mxu0 0.0
    %202 = vmatpush2.msra.mxu0 %v60
    %203 = vmatprep.subr.mxu0 0.0
    %204 = vmatpush2.msra.mxu0 %v59
    %205 = vmatprep.subr.mxu0 0.0
    %206 = vmatpush2.msra.mxu0 %v58
    %207 = vmatprep.subr.mxu0 0.0
    %208 = vmatpush2.msra.mxu0 %v57
    %209 = vmatprep.subr.mxu0 0.0
    %210 = vmatpush2.msra.mxu0 %v56
    %211 = vmatprep.subr.mxu0 0.0
    %212 = vmatpush2.msra.mxu0 %v55
    %213 = vmatprep.subr.mxu0 0.0
    %214 = vmatpush2.msra.mxu0 %v54
    %215 = vmatprep.subr.mxu0 0.0
    %216 = vmatpush2.msra.mxu0 %v53
    %217 = vmatprep.subr.mxu0 0.0
    %218 = vmatpush2.msra.mxu0 %v52
    %219 = vmatprep.mubr.f32.mxu0 %v35
    %220 = vmatmul.mubr.f32.gmra.mxu0 %v34
    %v221 = vpop.f32.mrf.mxu0
    %v222 = vadd.f32 %v152, %v221
    %v223 = vpop.f32.mrf.mxu0
    %224 = vdwg.mxu0
    %v225 = vadd.f32 %v33, %v222
    %vm226 = vcmask 261120
    %227 = vst.msk [vmem:[#allocation2] sm:$0xff] %vm226, %v225
    // Predicated region
    $region34: #{_mean_pool_pallas.1} parent=1 // pred_check
      %p228 = pneg %p27
    $region35: #{_mean_pool_pallas.1} parent=1 // pred_check_branch
      %230 = sbr.rel (%p228) target = $region37
    $region36: #{_mean_pool_pallas.1} parent=1 // pred_region
      %v231 = vld [vmem:[#allocation2] sm:$0xff]
      %v232 = vld [vmem:[%s2] sm:$0xff]
      %v233 = vld [vmem:[%s5] sm:$0xff]
      %v234 = vld [vmem:[%s5 + $0x8] sm:$0xff]
      %v235 = vld [vmem:[%s5 + $0x10] sm:$0xff]
      %v236 = vld [vmem:[%s5 + $0x18] sm:$0xff]
      %v238 = vsel %vm226, %v232, 0
      %240 = vmatprep.subr.mxu0 0.0
      %241 = vmatpush1.msra.mxu0 0.0
      %242 = vmatprep.subr.mxu0 0.0
      %243 = vmatpush1.msra.mxu0 0.0
      %244 = vmatprep.subr.mxu0 0.0
      %245 = vmatpush1.msra.mxu0 0.0
      %246 = vmatprep.subr.mxu0 0.0
      %247 = vmatpush1.msra.mxu0 0.0
      %248 = vmatprep.subr.mxu0 0.0
      %249 = vmatpush1.msra.mxu0 0.0
      %250 = vmatprep.subr.mxu0 0.0
      %251 = vmatpush1.msra.mxu0 0.0
      %252 = vmatprep.subr.mxu0 0.0
      %253 = vmatpush1.msra.mxu0 0.0
      %254 = vmatprep.subr.mxu0 0.0
      %255 = vmatpush1.msra.mxu0 0.0
      %256 = vmatprep.subr.mxu0 0.0
      %257 = vmatpush1.msra.mxu0 0.0
      %258 = vmatprep.subr.mxu0 0.0
      %259 = vmatpush1.msra.mxu0 0.0
      %260 = vmatprep.subr.mxu0 0.0
      %261 = vmatpush1.msra.mxu0 0.0
      %262 = vmatprep.subr.mxu0 0.0
      %263 = vmatpush1.msra.mxu0 0.0
      %264 = vmatprep.subr.mxu0 0.0
      %265 = vmatpush1.msra.mxu0 %v236
      %266 = vmatprep.subr.mxu0 0.0
      %267 = vmatpush1.msra.mxu0 %v235
      %268 = vmatprep.subr.mxu0 0.0
      %269 = vmatpush1.msra.mxu0 %v234
      %270 = vmatprep.subr.mxu0 0.0
      %271 = vmatpush1.msra.mxu0 %v233
      %272 = vmatprep.subr.mxu0 0.0
      %273 = vmatpush2.msra.mxu0 0.0
      %274 = vmatprep.subr.mxu0 0.0
      %275 = vmatpush2.msra.mxu0 0.0
      %276 = vmatprep.subr.mxu0 0.0
      %277 = vmatpush2.msra.mxu0 0.0
      %278 = vmatprep.subr.mxu0 0.0
      %279 = vmatpush2.msra.mxu0 0.0
      %280 = vmatprep.subr.mxu0 0.0
      %281 = vmatpush2.msra.mxu0 0.0
      %282 = vmatprep.subr.mxu0 0.0
      %283 = vmatpush2.msra.mxu0 0.0
      %284 = vmatprep.subr.mxu0 0.0
      %285 = vmatpush2.msra.mxu0 0.0
      %286 = vmatprep.subr.mxu0 0.0
      %287 = vmatpush2.msra.mxu0 0.0
      %288 = vmatprep.subr.mxu0 0.0
      %289 = vmatpush2.msra.mxu0 0.0
      %290 = vmatprep.subr.mxu0 0.0
      %291 = vmatpush2.msra.mxu0 0.0
      %292 = vmatprep.subr.mxu0 0.0
      %293 = vmatpush2.msra.mxu0 0.0
      %294 = vmatprep.subr.mxu0 0.0
      %295 = vmatpush2.msra.mxu0 0.0
      %296 = vmatprep.subr.mxu0 0.0
      %297 = vmatpush2.msra.mxu0 0.0
      %298 = vmatprep.subr.mxu0 0.0
      %299 = vmatpush2.msra.mxu0 0.0
      %300 = vmatprep.subr.mxu0 0.0
      %301 = vmatpush2.msra.mxu0 0.0
      %302 = vmatprep.subr.mxu0 0.0
      %303 = vmatpush2.msra.mxu0 0.0
      %304 = vmatprep.mubr.f32.mxu0 0.0
      %305 = vmatmul.mubr.f32.gmra.mxu0 %v238
      %v306 = vpop.f32.mrf.mxu0
      %v307 = vadd.f32 0.0, %v306
      %v308 = vpop.f32.mrf.mxu0
      %309 = vdwg.mxu0
      %v310 = vadd.f32 %v231, %v307
      %v311 = vld [vmem:[%s6] sm:$0x1]
      %v313 = vlaneseq
      %v314 = vshrl.u32 %v313, 7
      %v315 = vsub.s32 0, %v314
      %v316 = vrot.slane %v311, %v315
      %v318 = vadd.f32 %v310, %v316
      %vm319 = vcmp.gt.f32.partialorder %v318, 0.0
      %v320 = vmul.f32 %v318, 0.01
      %v321 = vsel %vm319, %v318, %v320
      %322 = vst.msk [vmem:[#allocation3] sm:$0xff] %vm226, %v321
    $region37: #{_mean_pool_pallas.1} parent=1 // pred_fallthru
      _
    // Predicated region
    $region38: #{_mean_pool_pallas.1} parent=1 // pred_check
      _
    $region39: #{_mean_pool_pallas.1} parent=1 // pred_check_branch
      %324 = sbr.rel (0) target = $region41
    $region40: #{_mean_pool_pallas.1} parent=1 // pred_region
      %s326 = ssub.s32 128, 128
      %327 = vsyncadd [#allocation4], %s326
      %s329 = sshll.u32 [#allocation3], 4
      %s330 = int_to_ptr.vmem [resolvable:$true] %s329
      %332 = dma.vmem_to_hbm [thread:$0]  %s330, 128, %s7, [#allocation4]
    $region41: #{_mean_pool_pallas.1} parent=1 // pred_fallthru
      _
    // Predicated region
    $region42: #{_mean_pool_pallas.1} parent=1 // pred_check
      _
    $region43: #{_mean_pool_pallas.1} parent=1 // pred_check_branch
      %334 = sbr.rel (0) target = $region45
    $region44: #{_mean_pool_pallas.1} parent=1 // pred_region
      %335 = dma.done [#allocation4], 128
    $region45: #{_mean_pool_pallas.1} parent=1 // pred_fallthru
      _
    %336 = vsyncpa [#allocation4], 1

</llo_original>
